<compile_context>
chip_gen: v7x
topology: tpu7x:2x2x1
jax: 0.10.0
libtpu: 0.0.40
codegen_flags: <defaults>
</compile_context>

<pallas_src>
import functools

import numpy as np
import jax
import jax.numpy as jnp
from jax import lax
from jax.experimental import pallas as pl
from jax.experimental.pallas import tpu as pltpu

# ----------------------------------------------------------------------------
# In-script "globals" that the PyTorch file pulled from config / WORDS_PATH.
# ----------------------------------------------------------------------------
ALPHABET = "abcdefghijklmnopqrstuvwxyzABCDEFGHIJKLMNOPQRSTUVWXYZ0123456789 "
MY_STRING = "deep learning with pallas kernels on tpu"
RAW_LEX = [
    "hello", "world", "kernel", "pallas", "mosaic", "tensor", "writer",
    "vision", "JAX", "TPU", "2024", "handwriting", "generator", "style",
]

MAX_LEN = 128            # lane-dense character axis (words are < 20 chars)
LEN_LANE = MAX_LEN - 1   # reserved lane that carries the per-word length
_ROW_PACK = 32           # int8 native sublane packing is (32, 128)
_TILE_CAP = 2048         # max rows per block (in+out dbl-buffered ~1 MiB int8)
_SPLIT_ROWS = 256        # above this, give the parallel axis >=2 steps (v7x)

_A_LOW, _Z_LOW = ord("a"), ord("z")
_A_UP, _Z_UP = ord("A"), ord("Z")
_D_0, _D_9 = ord("0"), ord("9")
_SPACE = ord(" ")


# ----------------------------------------------------------------------------
# Pallas kernel: strLabelConverter.encode hot path (closed-form char map).
#   out[n, l]        = 1-based ALPHABET index of char_codes[n, l] (0 for pad /
#                      out-of-vocab), for l < LEN_LANE
#   out[n, LEN_LANE] = number of non-zero char codes in row n
# ----------------------------------------------------------------------------
def _encode_kernel(chars_ref, out_ref):
    chars = chars_ref[...].astype(jnp.int32)        # int8 -> int32, [TILE_N, 128]

    # case-fold: a-z and A-Z share one range check after OR-ing bit 5
    folded = jnp.bitwise_or(chars, 32)
    is_alpha = jnp.logical_and(folded >= _A_LOW, folded <= _Z_LOW)
    is_upper = jnp.logical_and(chars >= _A_UP, chars <= _Z_UP)
    is_digit = jnp.logical_and(chars >= _D_0, chars <= _D_9)
    is_space = chars == _SPACE

    # ALPHABET = a-z (1..26) | A-Z (27..52) | 0-9 (53..62) | ' ' (63)
    alpha_code = folded - (_A_LOW - 1) + jnp.where(is_upper, 26, 0)
    enc = jnp.where(is_alpha, alpha_code,
          jnp.where(is_digit, chars - (_D_0 - 53),
          jnp.where(is_space, jnp.int32(63), jnp.int32(0))))

    # per-word length: lane-axis reduce (XLU); packed into reserved lane 127
    # via implicit [N,1] -> [N,128] broadcast.
    # NOTE: out-of-vocab (non-zero) chars encode to 0 but still count toward
    # the length (intentional; PyTorch strLabelConverter would fail on OOV).
    lens = jnp.sum((chars != 0).astype(jnp.int32), axis=-1, keepdims=True)
    col = lax.broadcasted_iota(jnp.int32, enc.shape, 1)
    out_ref[...] = jnp.where(col == LEN_LANE, lens, enc).astype(out_ref.dtype)


def _choose_tiling(n32):
    """Pick (tile_n, grid) for a 32-aligned row count with minimal padding."""
    if n32 <= _SPLIT_ROWS:
        return n32, 1                              # single step for small N
    grid = max(2, pl.cdiv(n32, _TILE_CAP))          # >=2 steps so v7x's 2 TCs work
    tile_n = _ROW_PACK * pl.cdiv(pl.cdiv(n32, grid), _ROW_PACK)
    return tile_n, grid


@functools.lru_cache(maxsize=None)
def _build_encode_call(tile_n, grid):
    """One jitted pallas_call per (tile_n, grid) bucket (avoids recompiles)."""
    return jax.jit(pl.pallas_call(
        _encode_kernel,
        out_shape=jax.ShapeDtypeStruct((tile_n * grid, MAX_LEN), jnp.int8),
        grid_spec=pltpu.PrefetchScalarGridSpec(
            num_scalar_prefetch=0,
            grid=(grid,),
            in_specs=[pl.BlockSpec((tile_n, MAX_LEN), lambda i: (i, 0))],
            out_specs=pl.BlockSpec((tile_n, MAX_LEN), lambda i: (i, 0)),
        ),
        compiler_params=pltpu.CompilerParams(
            dimension_semantics=("parallel",)),
    ))


def _to_str(w):
    return w.decode("utf-8") if isinstance(w, (bytes, bytearray)) else w


def _codes_array(words):
    """int8 ASCII codes, zero-padded; rows padded to (tile_n * grid)."""
    n = len(words)
    n32 = _ROW_PACK * pl.cdiv(max(n, 1), _ROW_PACK)
    tile_n, grid = _choose_tiling(n32)
    n_rows = tile_n * grid
    codes = np.zeros((n_rows, MAX_LEN), dtype=np.int8)
    for i, w in enumerate(words):
        w = w[:LEN_LANE]                 # never clobber the length lane
        codes[i, : len(w)] = [ord(c) for c in w]
    return codes, tile_n, grid


def pallas_encode_many(word_groups):
    """Encode several word lists with ONE pallas_call on a fused padded tile.

    Returns [(enc, lens), ...] in the order of `word_groups`, where
    enc has shape [len(group), max_len(group)] and lens has shape
    [len(group)], matching strLabelConverter.encode.
    """
    groups = [[_to_str(w) for w in g] for g in word_groups]
    flat = [w for g in groups for w in g]
    codes, tile_n, grid = _codes_array(flat)

    out_dev = _build_encode_call(tile_n, grid)(jnp.asarray(codes))
    # one D2H of the whole padded tile; slice with data-dependent shapes on
    # host (no per-shape XLA slice compiles / dispatches)
    out = np.asarray(jax.device_get(out_dev)).astype(np.int32)

    results, off = [], 0
    for g in groups:
        n = len(g)
        max_len = min(LEN_LANE, max(1, max((len(w) for w in g), default=1)))
        enc = jnp.asarray(out[off:off + n, :max_len])        # device_put only
        lens = jnp.asarray(out[off:off + n, LEN_LANE])
        results.append((enc, lens))
        off += n
    return results


# ----------------------------------------------------------------------------
# WriteViT (JAX) -- reproduces __init__ text setup + forward() semantics.
# ----------------------------------------------------------------------------
class WriteViT:
    def __init__(self, batch_size=2):
        self.batch_size = batch_size
        self.epsilon = 1e-07
        self.alphabet = ALPHABET

        # lexicon filtering, as in the PyTorch __init__ (WORDS_PATH -> RAW_LEX)
        lex, lex_upper_number = [], []
        for word in RAW_LEX:
            if len(word) < 20:
                if word.isupper() or word.isdigit():
                    lex_upper_number.append(word)
                else:
                    lex.append(word)
        self.lex = lex
        self.lex_upper_number = lex_upper_number

        # eval text encoding (MY_STRING), repeated over the batch; this hits
        # the same (32, 1) compiled bucket that forward() / encode() use.
        self.text = [j.encode() for j in MY_STRING.split(" ")]
        (self.eval_text_encode, self.eval_len_text), = pallas_encode_many(
            [self.text])
        self.eval_text_encode = jnp.asarray(
            np.tile(np.asarray(self.eval_text_encode)[None],
                    (self.batch_size, 1, 1)))

    # ---- strLabelConverter.encode equivalent (Pallas-backed) ----
    def encode(self, words):
        (enc, lens), = pallas_encode_many([words])
        return enc, lens

    # ---- forward() ----
    def forward(self, inp, key):
        self.real = inp["img"]            # NCHW, pass-through (to(DEVICE))
        self.label = inp["label"]
        self.sdata = inp["img"]
        self.ST_LEN = inp["swids"]

        # fake_y_dist: uniform categorical over the lexicon (host glue, like
        # torch.distributions.Categorical(...).sample([batch_size]))
        logits = jnp.zeros((len(self.lex),), dtype=jnp.float32)
        sample_lex_idx = jax.random.categorical(
            key, logits, shape=(self.batch_size,))
        fake_y = [self.lex[int(i)].encode("utf-8")
                  for i in np.asarray(sample_lex_idx)]
        self.words_fake = fake_y

        # single fused pallas_call for real-label + fake-label encodes
        (self.text_encode, self.len_text), \
            (self.text_encode_fake, self.len_text_fake) = pallas_encode_many(
                [self.label, fake_y])

        return {
            "real": self.real,
            "sdata": self.sdata,
            "ST_LEN": self.ST_LEN,
            "text_encode": self.text_encode,
            "len_text": self.len_text,
            "text_encode_fake": self.text_encode_fake,
            "len_text_fake": self.len_text_fake,
        }


# ----------------------------------------------------------------------------
# Main
# ----------------------------------------------------------------------------
if __name__ == "__main__":
    key = jax.random.PRNGKey(0)
    k_img, k_sample = jax.random.split(key)

    batch_size = 2
    # small grayscale handwriting-style images, NCHW
    img = jax.random.normal(k_img, (batch_size, 1, 16, 16), dtype=jnp.float32)
    labels = ["hello", "world"]
    swids = jnp.array([[16], [16]], dtype=jnp.int32)

    model = WriteViT(batch_size=batch_size)
    out = model.forward({"img": img, "label": labels, "swids": swids}, k_sample)

    jax.tree_util.tree_map(jax.block_until_ready, out)
    jax.block_until_ready(model.eval_text_encode)

    # ---- correctness check vs. pure-python reference of the encoder ----
    def ref_encode(words):
        ws = [_to_str(w) for w in words]
        ml = max(len(w) for w in ws)
        enc = np.zeros((len(ws), ml), dtype=np.int32)
        ln = np.zeros((len(ws),), dtype=np.int32)
        for i, w in enumerate(ws):
            enc[i, : len(w)] = [ALPHABET.index(c) + 1 for c in w]
            ln[i] = len(w)
        return enc, ln

    e_ref, l_ref = ref_encode(labels)
    assert np.array_equal(np.asarray(out["text_encode"]), e_ref)
    assert np.array_equal(np.asarray(out["len_text"]), l_ref)

    ef_ref, lf_ref = ref_encode(model.words_fake)
    assert np.array_equal(np.asarray(out["text_encode_fake"]), ef_ref)
    assert np.array_equal(np.asarray(out["len_text_fake"]), lf_ref)

    ee_ref, le_ref = ref_encode(model.text)
    assert np.array_equal(np.asarray(model.eval_text_encode[0]), ee_ref)
    assert np.array_equal(np.asarray(model.eval_len_text), le_ref)
    assert model.eval_text_encode.shape[0] == batch_size

    # standalone encode() reuses the same compiled bucket
    e2, l2 = model.encode(["JAX", "2024"])
    e2_ref, l2_ref = ref_encode(["JAX", "2024"])
    assert np.array_equal(np.asarray(e2), e2_ref)
    assert np.array_equal(np.asarray(l2), l2_ref)

    print("KERNEL_OK")
</pallas_src>

<mosaic_0001>
module attributes {stable_mosaic.version = 11 : i64} {
  func.func @_encode_kernel(%arg0: i32, %arg1: memref<32x128xi8, #tpu.memory_space<vmem>>, %arg2: memref<32x128xi8, #tpu.memory_space<vmem>>) attributes {dimension_semantics = [#tpu.dimension_semantics<parallel>], iteration_bounds = array<i64: 1>, scalar_prefetch = 0 : i64, scratch_operands = 0 : i64, tpu.core_type = #tpu.core_type<tc>, window_params = [{transform_indices = @transform_0, window_bounds = array<i64: 32, 128>}, {transform_indices = @transform_1, window_bounds = array<i64: 32, 128>}]} {
    %c0 = arith.constant 0 : index
    %c0_0 = arith.constant 0 : index
    %0 = vector.load %arg1[%c0, %c0_0] : memref<32x128xi8, #tpu.memory_space<vmem>>, vector<32x128xi8>
    %1 = arith.extsi %0 : vector<32x128xi8> to vector<32x128xi32>
    %c32_i32 = arith.constant 32 : i32
    %2 = vector.broadcast %c32_i32 : i32 to vector<32x128xi32>
    %3 = arith.ori %1, %2 : vector<32x128xi32>
    %c97_i32 = arith.constant 97 : i32
    %4 = vector.broadcast %c97_i32 : i32 to vector<32x128xi32>
    %5 = arith.cmpi sge, %3, %4 : vector<32x128xi32>
    %c122_i32 = arith.constant 122 : i32
    %6 = vector.broadcast %c122_i32 : i32 to vector<32x128xi32>
    %7 = arith.cmpi sle, %3, %6 : vector<32x128xi32>
    %8 = arith.andi %5, %7 : vector<32x128xi1>
    %c65_i32 = arith.constant 65 : i32
    %9 = vector.broadcast %c65_i32 : i32 to vector<32x128xi32>
    %10 = arith.cmpi sge, %1, %9 : vector<32x128xi32>
    %c90_i32 = arith.constant 90 : i32
    %11 = vector.broadcast %c90_i32 : i32 to vector<32x128xi32>
    %12 = arith.cmpi sle, %1, %11 : vector<32x128xi32>
    %13 = arith.andi %10, %12 : vector<32x128xi1>
    %c48_i32 = arith.constant 48 : i32
    %14 = vector.broadcast %c48_i32 : i32 to vector<32x128xi32>
    %15 = arith.cmpi sge, %1, %14 : vector<32x128xi32>
    %c57_i32 = arith.constant 57 : i32
    %16 = vector.broadcast %c57_i32 : i32 to vector<32x128xi32>
    %17 = arith.cmpi sle, %1, %16 : vector<32x128xi32>
    %18 = arith.andi %15, %17 : vector<32x128xi1>
    %c32_i32_1 = arith.constant 32 : i32
    %19 = vector.broadcast %c32_i32_1 : i32 to vector<32x128xi32>
    %20 = arith.cmpi eq, %1, %19 : vector<32x128xi32>
    %c96_i32 = arith.constant 96 : i32
    %21 = vector.broadcast %c96_i32 : i32 to vector<32x128xi32>
    %22 = arith.subi %3, %21 : vector<32x128xi32>
    %c26_i32 = arith.constant 26 : i32
    %c0_i32 = arith.constant 0 : i32
    %23 = vector.broadcast %c26_i32 : i32 to vector<32x128xi32>
    %24 = vector.broadcast %c0_i32 : i32 to vector<32x128xi32>
    %25 = arith.select %13, %23, %24 : vector<32x128xi1>, vector<32x128xi32>
    %26 = arith.addi %22, %25 : vector<32x128xi32>
    %c-5_i32 = arith.constant -5 : i32
    %27 = vector.broadcast %c-5_i32 : i32 to vector<32x128xi32>
    %28 = arith.subi %1, %27 : vector<32x128xi32>
    %c63_i32 = arith.constant 63 : i32
    %c0_i32_2 = arith.constant 0 : i32
    %29 = vector.broadcast %c63_i32 : i32 to vector<32x128xi32>
    %30 = vector.broadcast %c0_i32_2 : i32 to vector<32x128xi32>
    %31 = arith.select %20, %29, %30 : vector<32x128xi1>, vector<32x128xi32>
    %32 = arith.select %18, %28, %31 : vector<32x128xi1>, vector<32x128xi32>
    %33 = arith.select %8, %26, %32 : vector<32x128xi1>, vector<32x128xi32>
    %c0_i32_3 = arith.constant 0 : i32
    %34 = vector.broadcast %c0_i32_3 : i32 to vector<32x128xi32>
    %35 = arith.cmpi ne, %1, %34 : vector<32x128xi32>
    %36 = arith.extui %35 : vector<32x128xi1> to vector<32x128xi32>
    %cst = arith.constant dense<0> : vector<32xi32>
    %37 = vector.multi_reduction <add>, %36, %cst [1] : vector<32x128xi32> to vector<32xi32>
    %38 = vector.shape_cast %37 : vector<32xi32> to vector<32x1xi32>
    %39 = tpu.iota {dimensions = array<i32: 1>} : vector<32x128xi32>
    %c127_i32 = arith.constant 127 : i32
    %40 = vector.broadcast %c127_i32 : i32 to vector<32x128xi32>
    %41 = arith.cmpi eq, %39, %40 : vector<32x128xi32>
    %42 = vector.shape_cast %38 : vector<32x1xi32> to vector<32x1xi32>
    %43 = vector.broadcast %42 : vector<32x1xi32> to vector<32x128xi32>
    %44 = arith.select %41, %43, %33 : vector<32x128xi1>, vector<32x128xi32>
    %45 = arith.trunci %44 : vector<32x128xi32> to vector<32x128xi8>
    %c0_4 = arith.constant 0 : index
    %c0_5 = arith.constant 0 : index
    %46 = vector.load %arg2[%c0_4, %c0_5] : memref<32x128xi8, #tpu.memory_space<vmem>>, vector<32x128xi8>
    tpu.vector_store %arg2[%c0_4, %c0_5], %45 {strides = array<i32>} : memref<32x128xi8, #tpu.memory_space<vmem>>, vector<32x128xi8>,
    return
  }
  func.func @transform_0(%arg0: i32) -> (i32, i32) {
    %c0_i32 = arith.constant 0 : i32
    %c0_i32_0 = arith.constant 0 : i32
    return %arg0, %c0_i32 : i32, i32
  }
  func.func @transform_1(%arg0: i32) -> (i32, i32) {
    %c0_i32 = arith.constant 0 : i32
    %c0_i32_0 = arith.constant 0 : i32
    return %arg0, %c0_i32 : i32, i32
  }
}

</mosaic_0001>

<llo_original>
// kernel: tpu_custom_call.1
$region0: #{tpu_custom_call.1}
  #allocation0 [shape = 'u32[]', space=smem, size = 0x4, offset = 0x4, fixed_abs, tag = 'smem constant byte address 0x4 - core index']
  #allocation1 [shape = 'u32[144,128]{1,0:T(1,128)}', space=vmem, size = 0x12000, scoped, tag = 'internal scratch']
  %s0 = inlined_call_operand.hbm [shape: s8[32,128], index: 0, kind: input, shape index: {}]
  %s1 = inlined_call_operand.hbm [shape: s8[32,128], index: 1, kind: output, shape index: {}]
  %s2 = sld [smem:[#allocation0]]
  $region18: #{tpu_custom_call.1} parent=0
    _
  %s4 = ssub.s32 1, %s2
  %s5 = scalar_select 0, %s4, %s2
  $region1: #{tpu_custom_call.1} parent=0
    #allocation2 [shape = 'u8[4096]{0}', space=vmem, size = 0x1000, scoped, tag = 'input window, operand 0, single buffered']
    #allocation3 [shape = 's32[1]{0}', space=sflag, size = 0x4, scoped, tag = 'scoped memory for tpu_custom_call.1']
    #allocation4 [shape = 's32[1]{0}', space=sflag, size = 0x4, scoped, tag = 'scoped memory for tpu_custom_call.1']
    #allocation5 [shape = 'u8[4096]{0}', space=vmem, size = 0x1000, scoped, tag = 'output window, operand 0, single buffered']
    %6 = vsyncpa [#allocation3], 0
    %7 = vsyncpa [#allocation4], 0
    // Predicated region
    $region2: #{tpu_custom_call.1} parent=1 // pred_check
      _
    $region3: #{tpu_custom_call.1} parent=1 // pred_check_branch
      %9 = sbr.rel (0) target = $region5
    $region4: #{tpu_custom_call.1} parent=1 // pred_region
      %s11 = ssub.s32 128, 128
      %12 = vsyncadd [#allocation3], %s11
      %s14 = sshll.u32 [#allocation2], 4
      %s15 = int_to_ptr.vmem [resolvable:$true] %s14
      %17 = dma.hbm_to_vmem [thread:$0]  %s0, 128, %s15, [#allocation3]
    $region5: #{tpu_custom_call.1} parent=1 // pred_fallthru
      _
    // Predicated region
    $region6: #{tpu_custom_call.1} parent=1 // pred_check
      _
    $region7: #{tpu_custom_call.1} parent=1 // pred_check_branch
      %19 = sbr.rel (0) target = $region9
    $region8: #{tpu_custom_call.1} parent=1 // pred_region
      %20 = dma.done [#allocation3], 128
    $region9: #{tpu_custom_call.1} parent=1 // pred_fallthru
      _
    %v21 = vld [vmem:[#allocation2] sm:$0xff]
    %v22 = vunpack.c.0.s8 %v21
    %v23 = vunpack.c.1.s8 %v21
    %v24 = vunpack.c.2.s8 %v21
    %v25 = vunpack.c.3.s8 %v21
    %v26 = vor.u32 %v22, 32
    %v27 = vor.u32 %v23, 32
    %v28 = vor.u32 %v24, 32
    %v29 = vor.u32 %v25, 32
    %vm30 = vcmp.ge.s32.totalorder %v26, 97
    %vm31 = vcmp.ge.s32.totalorder %v27, 97
    %vm32 = vcmp.ge.s32.totalorder %v28, 97
    %vm33 = vcmp.ge.s32.totalorder %v29, 97
    %vm34 = vcmp.le.s32.totalorder %v26, 122
    %vm35 = vcmp.le.s32.totalorder %v27, 122
    %vm36 = vcmp.le.s32.totalorder %v28, 122
    %vm37 = vcmp.le.s32.totalorder %v29, 122
    %vm38 = vmand %vm30, %vm34
    %vm39 = vmand %vm31, %vm35
    %vm40 = vmand %vm32, %vm36
    %vm41 = vmand %vm33, %vm37
    %vm42 = vcmp.ge.s32.totalorder %v22, 65
    %vm43 = vcmp.ge.s32.totalorder %v23, 65
    %vm44 = vcmp.ge.s32.totalorder %v24, 65
    %vm45 = vcmp.ge.s32.totalorder %v25, 65
    %vm46 = vcmp.le.s32.totalorder %v22, 90
    %vm47 = vcmp.le.s32.totalorder %v23, 90
    %vm48 = vcmp.le.s32.totalorder %v24, 90
    %vm49 = vcmp.le.s32.totalorder %v25, 90
    %vm50 = vmand %vm42, %vm46
    %vm51 = vmand %vm43, %vm47
    %vm52 = vmand %vm44, %vm48
    %vm53 = vmand %vm45, %vm49
    %vm54 = vcmp.ge.s32.totalorder %v22, 48
    %vm55 = vcmp.ge.s32.totalorder %v23, 48
    %vm56 = vcmp.ge.s32.totalorder %v24, 48
    %vm57 = vcmp.ge.s32.totalorder %v25, 48
    %vm58 = vcmp.le.s32.totalorder %v22, 57
    %vm59 = vcmp.le.s32.totalorder %v23, 57
    %vm60 = vcmp.le.s32.totalorder %v24, 57
    %vm61 = vcmp.le.s32.totalorder %v25, 57
    %vm62 = vmand %vm54, %vm58
    %vm63 = vmand %vm55, %vm59
    %vm64 = vmand %vm56, %vm60
    %vm65 = vmand %vm57, %vm61
    %vm66 = vcmp.eq.s32.totalorder %v22, 32
    %vm67 = vcmp.eq.s32.totalorder %v23, 32
    %vm68 = vcmp.eq.s32.totalorder %v24, 32
    %vm69 = vcmp.eq.s32.totalorder %v25, 32
    %v70 = vsub.s32 %v26, 96
    %v71 = vsub.s32 %v27, 96
    %v72 = vsub.s32 %v28, 96
    %v73 = vsub.s32 %v29, 96
    %v74 = vsel %vm50, 26, 0
    %v75 = vsel %vm51, 26, 0
    %v76 = vsel %vm52, 26, 0
    %v77 = vsel %vm53, 26, 0
    %v78 = vadd.s32 %v70, %v74
    %v79 = vadd.s32 %v71, %v75
    %v80 = vadd.s32 %v72, %v76
    %v81 = vadd.s32 %v73, %v77
    %v82 = vsub.s32 %v22, 4294967291
    %v83 = vsub.s32 %v23, 4294967291
    %v84 = vsub.s32 %v24, 4294967291
    %v85 = vsub.s32 %v25, 4294967291
    %v86 = vsel %vm66, 63, 0
    %v87 = vsel %vm67, 63, 0
    %v88 = vsel %vm68, 63, 0
    %v89 = vsel %vm69, 63, 0
    %v90 = vsel %vm62, %v82, %v86
    %v91 = vsel %vm63, %v83, %v87
    %v92 = vsel %vm64, %v84, %v88
    %v93 = vsel %vm65, %v85, %v89
    %v94 = vsel %vm38, %v78, %v90
    %v95 = vsel %vm39, %v79, %v91
    %v96 = vsel %vm40, %v80, %v92
    %v97 = vsel %vm41, %v81, %v93
    %vm98 = vcmp.ne.s32.totalorder %v22, 0
    %vm99 = vcmp.ne.s32.totalorder %v23, 0
    %vm100 = vcmp.ne.s32.totalorder %v24, 0
    %vm101 = vcmp.ne.s32.totalorder %v25, 0
    %v102 = vsel %vm98, 1, 0
    %v103 = vsel %vm99, 1, 0
    %v104 = vsel %vm100, 1, 0
    %v105 = vsel %vm101, 1, 0
    %v106 = vand.u32 %v102, 65535
    %v107 = vshrl.u32 %v102, 16
    %v108 = vcvt.s32.f32 %v106
    %v109 = vcvt.s32.f32 %v107
    %110 = vadd.xlane.f32.xlu0 %v108
    %v111 = vpop.xlane.xlu0 %110
    %112 = vadd.xlane.f32.xlu0 %v109
    %v113 = vpop.xlane.xlu0 %112
    %v114 = vcvt.f32.s32 %v111
    %v115 = vcvt.f32.s32 %v113
    %v116 = vshll.u32 %v115, 16
    %v117 = vadd.s32 %v116, %v114
    %v118 = vand.u32 %v103, 65535
    %v119 = vshrl.u32 %v103, 16
    %v120 = vcvt.s32.f32 %v118
    %v121 = vcvt.s32.f32 %v119
    %122 = vadd.xlane.f32.xlu0 %v120
    %v123 = vpop.xlane.xlu0 %122
    %124 = vadd.xlane.f32.xlu0 %v121
    %v125 = vpop.xlane.xlu0 %124
    %v126 = vcvt.f32.s32 %v123
    %v127 = vcvt.f32.s32 %v125
    %v128 = vshll.u32 %v127, 16
    %v129 = vadd.s32 %v128, %v126
    %v130 = vand.u32 %v104, 65535
    %v131 = vshrl.u32 %v104, 16
    %v132 = vcvt.s32.f32 %v130
    %v133 = vcvt.s32.f32 %v131
    %134 = vadd.xlane.f32.xlu0 %v132
    %v135 = vpop.xlane.xlu0 %134
    %136 = vadd.xlane.f32.xlu0 %v133
    %v137 = vpop.xlane.xlu0 %136
    %v138 = vcvt.f32.s32 %v135
    %v139 = vcvt.f32.s32 %v137
    %v140 = vshll.u32 %v139, 16
    %v141 = vadd.s32 %v140, %v138
    %v142 = vand.u32 %v105, 65535
    %v143 = vshrl.u32 %v105, 16
    %v144 = vcvt.s32.f32 %v142
    %v145 = vcvt.s32.f32 %v143
    %146 = vadd.xlane.f32.xlu0 %v144
    %v147 = vpop.xlane.xlu0 %146
    %148 = vadd.xlane.f32.xlu0 %v145
    %v149 = vpop.xlane.xlu0 %148
    %v150 = vcvt.f32.s32 %v147
    %v151 = vcvt.f32.s32 %v149
    %v152 = vshll.u32 %v151, 16
    %v153 = vadd.s32 %v152, %v150
    %v154 = vlaneseq
    %v155 = vand.u32 %v154, 127
    %vm156 = vcmp.eq.s32.totalorder %v155, 127
    %v157 = vsel %vm156, %v117, %v94
    %v158 = vsel %vm156, %v129, %v95
    %v159 = vsel %vm156, %v141, %v96
    %v160 = vsel %vm156, %v153, %v97
    %v161 = vpack.c.b16 %v158, %v157
    %v162 = vpack.c.b16 %v160, %v159
    %v163 = vpack.c.b8 %v162, %v161
    %164 = vst [vmem:[#allocation5] sm:$0xff] %v163
    // Predicated region
    $region10: #{tpu_custom_call.1} parent=1 // pred_check
      _
    $region11: #{tpu_custom_call.1} parent=1 // pred_check_branch
      %166 = sbr.rel (0) target = $region13
    $region12: #{tpu_custom_call.1} parent=1 // pred_region
      %s168 = ssub.s32 128, 128
      %169 = vsyncadd [#allocation4], %s168
      %s171 = sshll.u32 [#allocation5], 4
      %s172 = int_to_ptr.vmem [resolvable:$true] %s171
      %174 = dma.vmem_to_hbm [thread:$0]  %s172, 128, %s1, [#allocation4]
    $region13: #{tpu_custom_call.1} parent=1 // pred_fallthru
      _
    // Predicated region
    $region14: #{tpu_custom_call.1} parent=1 // pred_check
      _
    $region15: #{tpu_custom_call.1} parent=1 // pred_check_branch
      %176 = sbr.rel (0) target = $region17
    $region16: #{tpu_custom_call.1} parent=1 // pred_region
      %177 = dma.done [#allocation4], 128
    $region17: #{tpu_custom_call.1} parent=1 // pred_fallthru
      _
    %178 = vsyncpa [#allocation3], 1
    %179 = vsyncpa [#allocation4], 1

</llo_original>
